<compile_context>
chip_gen: v6e
topology: v6e:2x2x1
jax: 0.10.0
libtpu: 0.0.40
codegen_flags: <defaults>
</compile_context>

<pallas_src>
import functools
import math

import jax
import jax.numpy as jnp
from jax.experimental import pallas as pl
from jax.experimental.pallas import tpu as pltpu


# Safe on v5e (raises the 16 MiB scoped default), v6e, and v7x (<= its 32 MiB
# scoped default, well under the 64 MiB physical VMEM).  All tile choices
# below keep double-buffered working sets comfortably inside this budget.
_VMEM_LIMIT_BYTES = 32 * 1024 * 1024


# ---------------------------------------------------------------------------
# LayerNorm kernel
# ---------------------------------------------------------------------------

def _layernorm_kernel(x_ref, w_ref, b_ref, o_ref, *, eps):
    # x_ref: (tile_rows, H); w_ref/b_ref: (1, H); o_ref: (tile_rows, H)
    x = x_ref[...].astype(jnp.float32)
    h = x.shape[-1]
    # Two-pass (centered) variance in f32: avoids E[x^2]-E[x]^2 cancellation
    # for large-mean residual-stream activations.  LayerNorm is mem-bound, so
    # the extra dependent reduction is hidden under the HBM stream.
    mean = jnp.sum(x, axis=-1, keepdims=True) * (1.0 / h)
    xc = x - mean
    var = jnp.sum(xc * xc, axis=-1, keepdims=True) * (1.0 / h)
    inv = jax.lax.rsqrt(var + eps)                        # EUP
    w = w_ref[...].astype(jnp.float32)                    # (1, H)
    b = b_ref[...].astype(jnp.float32)                    # (1, H)
    o_ref[...] = (xc * (inv * w) + b).astype(o_ref.dtype)


def _choose_layernorm_tile(rows, H, itemsize):
    """Largest row tile that keeps double-buffered in+out tiles inside a
    conservative VMEM budget, with bf16-friendly (16-row) alignment and >=2
    grid steps when rows allow (so v7x's 2 TensorCores both get work)."""
    vmem_budget = 16 * 1024 * 1024
    bytes_per_row = 4 * H * max(itemsize, 4)   # 2 bufs x (in+out), f32-ish
    cap = max(8, vmem_budget // max(bytes_per_row, 1))
    align = 16 if itemsize <= 2 else 8
    tile = min(1024, rows, cap)
    if tile >= align:
        tile = (tile // align) * align
        # Prefer a tile that divides rows: skips the jnp.pad + slice HBM
        # round trip (full extra read+write of the activation slab).
        for cand in range(tile, align - 1, -align):
            if rows % cand == 0:
                tile = cand
                break
        # If everything fits in one step, split so the parallel row axis can
        # shard across both TensorCores on v7x.
        if tile >= 2 * align and rows == tile:
            half = ((tile // 2) // align) * align
            if half >= align and rows % half == 0:
                tile = half
    return max(1, tile)


def layer_norm(x, weight, bias=None, *, eps=1e-5):
    """LayerNorm over the last dim of x (any leading dims), like F.layer_norm.
    Input/output dtype is preserved at the HBM boundary; compute is f32."""
    orig_shape = x.shape
    H = orig_shape[-1]
    rows = math.prod(orig_shape[:-1])
    x2 = x.reshape(rows, H)

    if bias is None:
        bias = jnp.zeros((H,), dtype=weight.dtype)
    w2 = weight.reshape(1, H)
    b2 = bias.reshape(1, H)

    tile = _choose_layernorm_tile(rows, H, jnp.dtype(x.dtype).itemsize)
    padded_rows = pl.cdiv(rows, tile) * tile
    xin = x2
    if padded_rows != rows:
        # TODO(synk): handle the ragged tail with a masked final block instead
        # of materializing a padded copy (extra HBM round trip).
        xin = jnp.pad(x2, ((0, padded_rows - rows), (0, 0)))

    grid = (padded_rows // tile,)
    out = pl.pallas_call(
        functools.partial(_layernorm_kernel, eps=eps),
        out_shape=jax.ShapeDtypeStruct((padded_rows, H), x.dtype),
        grid_spec=pltpu.PrefetchScalarGridSpec(
            num_scalar_prefetch=0,
            grid=grid,
            in_specs=[
                pl.BlockSpec((tile, H), lambda i: (i, 0)),
                pl.BlockSpec((1, H), lambda i: (0, 0)),
                pl.BlockSpec((1, H), lambda i: (0, 0)),
            ],
            out_specs=pl.BlockSpec((tile, H), lambda i: (i, 0)),
        ),
        compiler_params=pltpu.CompilerParams(
            dimension_semantics=("parallel",),
            vmem_limit_bytes=_VMEM_LIMIT_BYTES),
    )(xin, w2, b2)

    if padded_rows != rows:
        out = out[:rows]
    return out.reshape(orig_shape)


# ---------------------------------------------------------------------------
# Linear (matmul + bias [+ new_gelu] [+ fused residual]) kernel
# ---------------------------------------------------------------------------

_GELU_C = math.sqrt(2.0 / math.pi)


def _gelu_f32(x):
    # GPT "new_gelu": 0.5*x*(1+tanh(sqrt(2/pi)*(x+0.044715*x^3)))
    return 0.5 * x * (1.0 + jnp.tanh(_GELU_C * (x + 0.044715 * (x * x * x))))


def _linear_kernel(x_ref, w_ref, b_ref, *rest, activation, has_residual):
    if has_residual:
        r_ref, o_ref, acc_ref = rest
    else:
        r_ref = None
        o_ref, acc_ref = rest

    @pl.when(pl.program_id(2) == 0)
    def _():
        acc_ref[...] = jnp.zeros_like(acc_ref)

    # Native-dtype operands (bf16 inputs stay bf16 on the MXU); f32 accumulate.
    acc_ref[...] += jnp.dot(x_ref[...], w_ref[...],
                            preferred_element_type=jnp.float32)

    @pl.when(pl.program_id(2) == pl.num_programs(2) - 1)
    def _():
        acc = acc_ref[...] + b_ref[...].astype(jnp.float32)
        if activation == "gelu":
            acc = _gelu_f32(acc)
        if has_residual:
            acc = acc + r_ref[...].astype(jnp.float32)
        o_ref[...] = acc.astype(o_ref.dtype)


def _pick_tile(dim, target, aligns):
    """Largest tile <= target that divides dim, trying alignments in
    preference order (e.g. (256, 128) keeps the 256x256 MXUs on v6e/v7x full,
    128 fallback for shapes like vocab=50304; 128-multiples are also fine on
    v5e's 4x128x128 MXUs).  Falls back to padding only if no divisor exists."""
    if dim <= target:
        return dim  # full extent is always a legal block
    for align in aligns:
        start = max(align, (target // align) * align)
        for cand in range(start, align - 1, -align):
            if dim % cand == 0:
                return cand
    align = aligns[-1]
    return max(align, (target // align) * align)  # caller pads dim up


def linear(x, w, b=None, *, activation=None, residual=None):
    """y = act(x @ w + b) [+ residual] over the last dim of x.
    w: (K, N), b: (N,) or None, residual: same shape as the output or None."""
    orig_shape = x.shape
    K = orig_shape[-1]
    N = w.shape[1]
    M = math.prod(orig_shape[:-1])
    x2 = x.reshape(M, K)
    if b is None:
        b = jnp.zeros((N,), dtype=x.dtype)
    b2 = b.reshape(1, N)
    r2 = residual.reshape(M, N) if residual is not None else None

    tm = _pick_tile(M, 512, (16, 8))        # 16-row pref: bf16 sublane packing
    tn = _pick_tile(N, 512, (256, 128))     # lane-dense, 256-aligned output
    tk = _pick_tile(K, 1024, (256, 128))    # big K tiles: fewer acc revisits

    Mp = pl.cdiv(M, tm) * tm
    Kp = pl.cdiv(K, tk) * tk
    Np = pl.cdiv(N, tn) * tn
    # TODO(synk): if padding ever triggers (no divisor tile), pre-pad the
    # weights once outside the forward (or mask the ragged block) instead of
    # re-padding per call; standard GPT shapes take the divisor path.
    if (Mp, Kp) != (M, K):
        x2 = jnp.pad(x2, ((0, Mp - M), (0, Kp - K)))
    w2 = w
    if (Kp, Np) != (K, N):
        w2 = jnp.pad(w, ((0, Kp - K), (0, Np - N)))
    if Np != N:
        b2 = jnp.pad(b2, ((0, 0), (0, Np - N)))
    if r2 is not None and (Mp, Np) != (M, N):
        r2 = jnp.pad(r2, ((0, Mp - M), (0, Np - N)))

    has_residual = r2 is not None
    in_specs = [
        pl.BlockSpec((tm, tk), lambda i, j, k: (i, k)),
        pl.BlockSpec((tk, tn), lambda i, j, k: (k, j)),
        pl.BlockSpec((1, tn), lambda i, j, k: (0, j)),
    ]
    args = [x2, w2, b2]
    if has_residual:
        # Block index ignores k (innermost axis) -> fetched once per (i, j).
        in_specs.append(pl.BlockSpec((tm, tn), lambda i, j, k: (i, j)))
        args.append(r2)

    grid = (Mp // tm, Np // tn, Kp // tk)
    out = pl.pallas_call(
        functools.partial(_linear_kernel, activation=activation,
                          has_residual=has_residual),
        out_shape=jax.ShapeDtypeStruct((Mp, Np), x.dtype),
        grid_spec=pltpu.PrefetchScalarGridSpec(
            num_scalar_prefetch=0,
            grid=grid,
            in_specs=in_specs,
            out_specs=pl.BlockSpec((tm, tn), lambda i, j, k: (i, j)),
            scratch_shapes=[pltpu.VMEM((tm, tn), jnp.float32)],
        ),
        compiler_params=pltpu.CompilerParams(
            dimension_semantics=("parallel", "parallel", "arbitrary"),
            vmem_limit_bytes=_VMEM_LIMIT_BYTES),
    )(*args)

    if (Mp, Np) != (M, N):
        out = out[:M, :N]
    return out.reshape(orig_shape[:-1] + (N,))


# ---------------------------------------------------------------------------
# Causal self-attention (flash-attention style, online softmax, all heads
# per block, no head split/merge transposes)
# ---------------------------------------------------------------------------

def _attn_kernel(q_ref, k_ref, v_ref, o_ref, m_sc, l_sc, acc_sc,
                 *, scale, n_head, tq, tkv):
    ki = pl.program_id(2)
    C = q_ref.shape[-1]
    D = C // n_head

    @pl.when(ki == 0)
    def _():
        m_sc[...] = jnp.full(m_sc.shape, -jnp.inf, jnp.float32)
        l_sc[...] = jnp.zeros_like(l_sc)
        acc_sc[...] = jnp.zeros_like(acc_sc)

    q0 = pl.program_id(1) * tq
    k0 = ki * tkv

    # Skip causally-dead blocks (every key strictly after every query row):
    # roughly halves MXU/VPU work for causal prefill.
    @pl.when(k0 <= q0 + tq - 1)
    def _():
        q = q_ref[0]          # (tq, C)  native dtype -> bf16 MXU when bf16
        k = k_ref[0]          # (tkv, C)
        v = v_ref[0]          # (tkv, C)

        q_pos = q0 + jax.lax.broadcasted_iota(jnp.int32, (tq, tkv), 0)
        k_pos = k0 + jax.lax.broadcasted_iota(jnp.int32, (tq, tkv), 1)
        mask = k_pos <= q_pos                       # shared across heads

        for h in range(n_head):                     # static unroll over heads
            qh = q[:, h * D:(h + 1) * D]
            kh = k[:, h * D:(h + 1) * D]
            vh = v[:, h * D:(h + 1) * D]

            s = jax.lax.dot_general(qh, kh, (((1,), (1,)), ((), ())),
                                    preferred_element_type=jnp.float32)
            s = jnp.where(mask, s * scale, -jnp.inf)

            m_prev = m_sc[h]                        # (tq, 1)
            m_new = jnp.maximum(m_prev, jnp.max(s, axis=-1, keepdims=True))
            alpha = jnp.exp(m_prev - m_new)
            p = jnp.exp(s - m_new)
            l_sc[h] = alpha * l_sc[h] + jnp.sum(p, axis=-1, keepdims=True)
            acc_sc[h] = alpha * acc_sc[h] + jnp.dot(
                p.astype(vh.dtype), vh, preferred_element_type=jnp.float32)
            m_sc[h] = m_new

    @pl.when(ki == pl.num_programs(2) - 1)
    def _():
        for h in range(n_head):
            inv = pl.reciprocal(l_sc[h], approx=True)   # EUP slot, ~free
            o_ref[0, :, h * D:(h + 1) * D] = (acc_sc[h] * inv).astype(o_ref.dtype)


def _pick_seq_tile(T, target=256):
    if T <= target:
        return T
    for cand in range(target, 7, -8):
        if T % cand == 0:
            return cand
    # TODO(synk): for prime T > target this falls back to a single (T, T)
    # score block; fine for typical block sizes, may pressure VMEM otherwise.
    return T


def causal_attention(q, k, v, n_head):
    """Equivalent of scaled_dot_product_attention(q,k,v,is_causal=True, p=0).
    q/k/v stay in their (B, T, C) layout — no head split/merge transposes."""
    B, T, C = q.shape
    D = C // n_head
    tq = _pick_seq_tile(T)
    tkv = _pick_seq_tile(T)
    scale = 1.0 / math.sqrt(D)
    grid = (B, T // tq, T // tkv)

    return pl.pallas_call(
        functools.partial(_attn_kernel, scale=scale, n_head=n_head,
                          tq=tq, tkv=tkv),
        out_shape=jax.ShapeDtypeStruct((B, T, C), q.dtype),
        grid_spec=pltpu.PrefetchScalarGridSpec(
            num_scalar_prefetch=0,
            grid=grid,
            in_specs=[
                pl.BlockSpec((1, tq, C), lambda b, qi, ki: (b, qi, 0)),
                pl.BlockSpec((1, tkv, C), lambda b, qi, ki: (b, ki, 0)),
                pl.BlockSpec((1, tkv, C), lambda b, qi, ki: (b, ki, 0)),
            ],
            out_specs=pl.BlockSpec((1, tq, C), lambda b, qi, ki: (b, qi, 0)),
            scratch_shapes=[
                pltpu.VMEM((n_head, tq, 1), jnp.float32),   # running max
                pltpu.VMEM((n_head, tq, 1), jnp.float32),   # running denom
                pltpu.VMEM((n_head, tq, D), jnp.float32),   # running output
            ],
        ),
        compiler_params=pltpu.CompilerParams(
            dimension_semantics=("parallel", "parallel", "arbitrary"),
            vmem_limit_bytes=_VMEM_LIMIT_BYTES),
    )(q, k, v)


# ---------------------------------------------------------------------------
# GPT forward (prefill, targets=None)
# ---------------------------------------------------------------------------

def gpt_forward(emb, params, cfg):
    B, T, C = emb.shape
    assert T <= cfg["block_size"]
    x = emb + params["wpe"][:T][None, :, :].astype(emb.dtype)  # drop(p=0) = id
    new_kvcache = []
    for lp in params["blocks"]:
        h = layer_norm(x, lp["ln1_w"], lp["ln1_b"])
        qkv = linear(h, lp["attn_w"], lp["attn_b"])
        q, k, v = jnp.split(qkv, 3, axis=-1)        # k, v are kvcache outputs
        new_kvcache.append((k, v))
        a = causal_attention(q, k, v, cfg["n_head"])
        x = linear(a, lp["proj_w"], lp["proj_b"], residual=x)       # fused +x
        h2 = layer_norm(x, lp["ln2_w"], lp["ln2_b"])
        m = linear(h2, lp["fc_w"], lp["fc_b"], activation="gelu")
        x = linear(m, lp["mproj_w"], lp["mproj_b"], residual=x)     # fused +x
    x = layer_norm(x, params["lnf_w"], params["lnf_b"])
    logits = linear(x[:, -1:, :], params["lm_head_w"], None)  # last token only
    return logits, new_kvcache


# ---------------------------------------------------------------------------
# Plain-JAX reference (for correctness check)
# ---------------------------------------------------------------------------

def _ref_layer_norm(x, w, b, eps=1e-5):
    mu = jnp.mean(x, axis=-1, keepdims=True)
    var = jnp.mean((x - mu) ** 2, axis=-1, keepdims=True)
    return (x - mu) / jnp.sqrt(var + eps) * w + b


def _ref_gelu(x):
    return 0.5 * x * (1.0 + jnp.tanh(_GELU_C * (x + 0.044715 * x ** 3)))


def _ref_attention(q, k, v, n_head):
    B, T, C = q.shape
    D = C // n_head
    qh = q.reshape(B, T, n_head, D).transpose(0, 2, 1, 3)
    kh = k.reshape(B, T, n_head, D).transpose(0, 2, 1, 3)
    vh = v.reshape(B, T, n_head, D).transpose(0, 2, 1, 3)
    s = jnp.einsum("bhqd,bhkd->bhqk", qh, kh) / math.sqrt(D)
    mask = jnp.tril(jnp.ones((T, T), dtype=bool))
    s = jnp.where(mask[None, None], s, -jnp.inf)
    p = jax.nn.softmax(s, axis=-1)
    y = jnp.einsum("bhqk,bhkd->bhqd", p, vh)
    return y.transpose(0, 2, 1, 3).reshape(B, T, C)


def gpt_reference(emb, params, cfg):
    B, T, C = emb.shape
    x = emb + params["wpe"][:T][None]
    for lp in params["blocks"]:
        h = _ref_layer_norm(x, lp["ln1_w"], lp["ln1_b"])
        qkv = h @ lp["attn_w"] + lp["attn_b"]
        q, k, v = jnp.split(qkv, 3, axis=-1)
        a = _ref_attention(q, k, v, cfg["n_head"])
        x = x + (a @ lp["proj_w"] + lp["proj_b"])
        h2 = _ref_layer_norm(x, lp["ln2_w"], lp["ln2_b"])
        m = _ref_gelu(h2 @ lp["fc_w"] + lp["fc_b"])
        x = x + (m @ lp["mproj_w"] + lp["mproj_b"])
    x = _ref_layer_norm(x, params["lnf_w"], params["lnf_b"])
    return x[:, -1:, :] @ params["lm_head_w"]


# ---------------------------------------------------------------------------
# Deterministic parameter init (mirrors GPT._init_weights)
# ---------------------------------------------------------------------------

def init_params(key, cfg):
    n_layer = cfg["n_layer"]
    n_embd = cfg["n_embd"]
    std = 0.02
    proj_std = std / math.sqrt(2 * n_layer)
    keys = iter(jax.random.split(key, 2 + 4 * n_layer))

    def nrm(shape, s=std):
        return s * jax.random.normal(next(keys), shape, dtype=jnp.float32)

    params = {
        "wpe": nrm((cfg["block_size"], n_embd)),
        "blocks": [],
        "lnf_w": jnp.ones((n_embd,), jnp.float32),
        "lnf_b": jnp.zeros((n_embd,), jnp.float32),
    }
    for _ in range(n_layer):
        params["blocks"].append(dict(
            ln1_w=jnp.ones((n_embd,), jnp.float32),
            ln1_b=jnp.zeros((n_embd,), jnp.float32),
            attn_w=nrm((n_embd, 3 * n_embd)),
            attn_b=jnp.zeros((3 * n_embd,), jnp.float32),
            proj_w=nrm((n_embd, n_embd), proj_std),
            proj_b=jnp.zeros((n_embd,), jnp.float32),
            ln2_w=jnp.ones((n_embd,), jnp.float32),
            ln2_b=jnp.zeros((n_embd,), jnp.float32),
            fc_w=nrm((n_embd, 4 * n_embd)),
            fc_b=jnp.zeros((4 * n_embd,), jnp.float32),
            mproj_w=nrm((4 * n_embd, n_embd), proj_std),
            mproj_b=jnp.zeros((n_embd,), jnp.float32),
        ))
    params["lm_head_w"] = nrm((n_embd, cfg["vocab_size"]))
    return params


if __name__ == "__main__":
    cfg = dict(n_layer=2, n_head=4, n_embd=32, block_size=16, vocab_size=128)
    B, T = 2, 8

    key = jax.random.PRNGKey(0)
    k_emb, k_params = jax.random.split(key)
    emb = jax.random.normal(k_emb, (B, T, cfg["n_embd"]), dtype=jnp.float32)
    params = init_params(k_params, cfg)

    # f32 run + tight-ish correctness check against the plain-JAX reference.
    logits, kvcache = gpt_forward(emb, params, cfg)
    jax.block_until_ready(logits)

    assert logits.shape == (B, 1, cfg["vocab_size"]), logits.shape
    assert len(kvcache) == cfg["n_layer"]

    ref_logits = gpt_reference(emb, params, cfg)
    max_err = float(jnp.max(jnp.abs(logits - ref_logits)))
    assert jnp.allclose(logits, ref_logits, atol=5e-3, rtol=5e-3), (
        f"mismatch vs plain-JAX reference: max abs err = {max_err}")

    # bf16 smoke run: exercises the native-dtype (bf16 MXU) matmul path.
    emb_bf = emb.astype(jnp.bfloat16)
    params_bf = jax.tree_util.tree_map(
        lambda p: p.astype(jnp.bfloat16), params)
    logits_bf, _ = gpt_forward(emb_bf, params_bf, cfg)
    jax.block_until_ready(logits_bf)
    assert logits_bf.shape == (B, 1, cfg["vocab_size"])
    assert bool(jnp.all(jnp.isfinite(logits_bf.astype(jnp.float32))))

    print("KERNEL_OK")
</pallas_src>

<mosaic_0001>
module attributes {stable_mosaic.version = 11 : i64} {
  func.func @_layernorm_kernel(%arg0: i32, %arg1: memref<8x32xf32, #tpu.memory_space<vmem>>, %arg2: memref<1x32xf32, #tpu.memory_space<vmem>>, %arg3: memref<1x32xf32, #tpu.memory_space<vmem>>, %arg4: memref<8x32xf32, #tpu.memory_space<vmem>>) attributes {dimension_semantics = [#tpu.dimension_semantics<parallel>], iteration_bounds = array<i64: 2>, scalar_prefetch = 0 : i64, scratch_operands = 0 : i64, tpu.core_type = #tpu.core_type<tc>, window_params = [{transform_indices = @transform_0, window_bounds = array<i64: 8, 32>}, {pipeline_mode = #tpu.pipeline_mode<synchronous>, transform_indices = @transform_1, window_bounds = array<i64: 1, 32>}, {pipeline_mode = #tpu.pipeline_mode<synchronous>, transform_indices = @transform_2, window_bounds = array<i64: 1, 32>}, {transform_indices = @transform_3, window_bounds = array<i64: 8, 32>}]} {
    %c0 = arith.constant 0 : index
    %c0_0 = arith.constant 0 : index
    %0 = vector.load %arg1[%c0, %c0_0] : memref<8x32xf32, #tpu.memory_space<vmem>>, vector<8x32xf32>
    %cst = arith.constant dense<0.000000e+00> : vector<8xf32>
    %1 = vector.multi_reduction <add>, %0, %cst [1] : vector<8x32xf32> to vector<8xf32>
    %2 = vector.shape_cast %1 : vector<8xf32> to vector<8x1xf32>
    %cst_1 = arith.constant 3.125000e-02 : f32
    %3 = vector.broadcast %cst_1 : f32 to vector<8x1xf32>
    %4 = arith.mulf %2, %3 : vector<8x1xf32>
    %5 = vector.broadcast %4 : vector<8x1xf32> to vector<8x32xf32>
    %6 = arith.subf %0, %5 : vector<8x32xf32>
    %7 = arith.mulf %6, %6 : vector<8x32xf32>
    %cst_2 = arith.constant dense<0.000000e+00> : vector<8xf32>
    %8 = vector.multi_reduction <add>, %7, %cst_2 [1] : vector<8x32xf32> to vector<8xf32>
    %9 = vector.shape_cast %8 : vector<8xf32> to vector<8x1xf32>
    %cst_3 = arith.constant 3.125000e-02 : f32
    %10 = vector.broadcast %cst_3 : f32 to vector<8x1xf32>
    %11 = arith.mulf %9, %10 : vector<8x1xf32>
    %cst_4 = arith.constant 9.99999974E-6 : f32
    %12 = vector.broadcast %cst_4 : f32 to vector<8x1xf32>
    %13 = arith.addf %11, %12 : vector<8x1xf32>
    %14 = math.rsqrt %13 : vector<8x1xf32>
    %c0_5 = arith.constant 0 : index
    %c0_6 = arith.constant 0 : index
    %15 = vector.load %arg2[%c0_5, %c0_6] : memref<1x32xf32, #tpu.memory_space<vmem>>, vector<1x32xf32>
    %c0_7 = arith.constant 0 : index
    %c0_8 = arith.constant 0 : index
    %16 = vector.load %arg3[%c0_7, %c0_8] : memref<1x32xf32, #tpu.memory_space<vmem>>, vector<1x32xf32>
    %17 = vector.broadcast %14 : vector<8x1xf32> to vector<8x32xf32>
    %18 = vector.broadcast %15 : vector<1x32xf32> to vector<8x32xf32>
    %19 = arith.mulf %17, %18 : vector<8x32xf32>
    %20 = arith.mulf %6, %19 : vector<8x32xf32>
    %21 = vector.broadcast %16 : vector<1x32xf32> to vector<8x32xf32>
    %22 = arith.addf %20, %21 : vector<8x32xf32>
    %c0_9 = arith.constant 0 : index
    %c0_10 = arith.constant 0 : index
    %23 = vector.load %arg4[%c0_9, %c0_10] : memref<8x32xf32, #tpu.memory_space<vmem>>, vector<8x32xf32>
    tpu.vector_store %arg4[%c0_9, %c0_10], %22 {strides = array<i32>} : memref<8x32xf32, #tpu.memory_space<vmem>>, vector<8x32xf32>,
    return
  }
  func.func @transform_0(%arg0: i32) -> (i32, i32) {
    %c0_i32 = arith.constant 0 : i32
    %c0_i32_0 = arith.constant 0 : i32
    return %arg0, %c0_i32 : i32, i32
  }
  func.func @transform_1(%arg0: i32) -> (i32, i32) {
    %c0_i32 = arith.constant 0 : i32
    %c0_i32_0 = arith.constant 0 : i32
    %c0_i32_1 = arith.constant 0 : i32
    return %c0_i32, %c0_i32_0 : i32, i32
  }
  func.func @transform_2(%arg0: i32) -> (i32, i32) {
    %c0_i32 = arith.constant 0 : i32
    %c0_i32_0 = arith.constant 0 : i32
    %c0_i32_1 = arith.constant 0 : i32
    return %c0_i32, %c0_i32_0 : i32, i32
  }
  func.func @transform_3(%arg0: i32) -> (i32, i32) {
    %c0_i32 = arith.constant 0 : i32
    %c0_i32_0 = arith.constant 0 : i32
    return %arg0, %c0_i32 : i32, i32
  }
}

</mosaic_0001>

<llo_original>
// kernel: tpu_custom_call.1
$region0: #{tpu_custom_call.1}
  #allocation0 [shape = 'u32[]', space=smem, size = 0x4, offset = 0x4, fixed_abs, tag = 'smem constant byte address 0x4 - core index']
  #allocation1 [shape = 'u32[144,128]{1,0:T(1,128)}', space=vmem, size = 0x12000, scoped, tag = 'internal scratch']
  %s0 = inlined_call_operand.hbm [shape: f32[16,32], index: 0, kind: input, shape index: {}]
  %s1 = inlined_call_operand.vmem [shape: f32[1,32], index: 1, kind: input, shape index: {}]
  %s2 = inlined_call_operand.vmem [shape: f32[1,32], index: 2, kind: input, shape index: {}]
  %s3 = inlined_call_operand.hbm [shape: f32[16,32], index: 3, kind: output, shape index: {}]
  %s4 = sld [smem:[#allocation0]]
  $region49: #{tpu_custom_call.1} parent=0
    _
  %s6 = ssub.s32 1, %s4
  %s7 = scalar_select 0, %s6, %s4
  $region1: #{tpu_custom_call.1} parent=0
    #allocation2 [shape = 'u8[8192]{0}', space=vmem, size = 0x2000, scoped, tag = 'input window, operand 0']
    #allocation3 [shape = 's32[2]{0}', space=sflag, size = 0x8, scoped, tag = 'scoped memory for tpu_custom_call.1']
    #allocation4 [shape = 's32[2]{0}', space=sflag, size = 0x8, scoped, tag = 'scoped memory for tpu_custom_call.1']
    #allocation5 [shape = 'u8[8192]{0}', space=vmem, size = 0x2000, scoped, tag = 'output window, operand 0']
    %8 = vsyncpa [#allocation3], 0
    %s9 = scalar_lea.sflag [#allocation3], 1
    %10 = vsyncpa %s9, 0
    %11 = vsyncpa [#allocation4], 0
    %s12 = scalar_lea.sflag [#allocation4], 1
    %13 = vsyncpa %s12, 0
    loop: start=0, step=1, limit=4
    $region2: #{tpu_custom_call.1} parent=1 // loop_pre_header
      _
    $region3: #{tpu_custom_call.1} parent=1 // loop_header
      %s15 = sphi 0, %s19
      %p16 = scmp.ge.s32.totalorder %s15, 4
      %s25 = sphi 0, %s27
      %s28 = sphi 0, %s25
      %s29 = sphi 0, %s28
      %s45 = sphi 0, %s29
      %s49 = sphi 0, %s49
      %s51 = sphi 0, %s49
      %s52 = sphi 0, %s51
      %s66 = sphi 0, %s52
      %s70 = sphi 0, %s70
      %s72 = sphi 0, %s70
      %s73 = sphi 0, %s72
      %s87 = sphi 0, %s73
      %s93 = sphi 0, %s95
      %s96 = sphi 0, %s93
      %s97 = sphi 0, %s96
      %s113 = sphi 0, %s97
    $region4: #{tpu_custom_call.1} parent=1 // loop_header_branch
      %18 = sbr.rel (%p16) target = $region8
    $region5: #{tpu_custom_call.1} parent=1 // loop_body
      %s20 = ssub.s32 %s15, 1
      %s21 = ssub.s32 %s15, 2
      %s22 = sadd.s32 %s15, 1
      %s23 = ssub.s32 %s15, %s22
      %p24 = scmp.eq.s32.totalorder %s23, 0
      %s26 = sadd.s32 %s25, 1
      %s27 = scalar_select %p24, %s25, %s26
      %p30 = pneg %p24
      %p31 = scmp.eq.s32.totalorder %s15, 1
      %p32 = por %p30, %p31
      %p33 = scmp.ne.s32.totalorder %s25, %s28
      %p34 = scmp.eq.s32.totalorder %s15, 0
      %p35 = por %p33, %p34
      %p36 = scmp.ne.s32.totalorder %s25, %s28
      %p37 = scmp.eq.s32.totalorder %s20, 1
      %p38 = por %p36, %p37
      %p39 = scmp.ne.s32.totalorder %s28, %s29
      %p40 = scmp.eq.s32.totalorder %s20, 0
      %p41 = por %p39, %p40
      %p42 = scmp.ne.s32.totalorder %s28, %s29
      %p43 = scmp.eq.s32.totalorder %s21, 1
      %p44 = por %p42, %p43
      %p46 = scmp.ne.s32.totalorder %s29, %s45
      %p47 = scmp.eq.s32.totalorder %s21, 0
      %p48 = por %p46, %p47
      %s50 = sadd.s32 %s49, 1
      %p53 = scmp.eq.s32.totalorder %s15, 1
      %p54 = scmp.ne.s32.totalorder %s49, %s51
      %p55 = scmp.eq.s32.totalorder %s15, 0
      %p56 = por %p54, %p55
      %p57 = scmp.ne.s32.totalorder %s49, %s51
      %p58 = scmp.eq.s32.totalorder %s20, 1
      %p59 = por %p57, %p58
      %p60 = scmp.ne.s32.totalorder %s51, %s52
      %p61 = scmp.eq.s32.totalorder %s20, 0
      %p62 = por %p60, %p61
      %p63 = scmp.ne.s32.totalorder %s51, %s52
      %p64 = scmp.eq.s32.totalorder %s21, 1
      %p65 = por %p63, %p64
      %p67 = scmp.ne.s32.totalorder %s52, %s66
      %p68 = scmp.eq.s32.totalorder %s21, 0
      %p69 = por %p67, %p68
      %s71 = sadd.s32 %s70, 1
      %p74 = scmp.eq.s32.totalorder %s15, 1
      %p75 = scmp.ne.s32.totalorder %s70, %s72
      %p76 = scmp.eq.s32.totalorder %s15, 0
      %p77 = por %p75, %p76
      %p78 = scmp.ne.s32.totalorder %s70, %s72
      %p79 = scmp.eq.s32.totalorder %s20, 1
      %p80 = por %p78, %p79
      %p81 = scmp.ne.s32.totalorder %s72, %s73
      %p82 = scmp.eq.s32.totalorder %s20, 0
      %p83 = por %p81, %p82
      %p84 = scmp.ne.s32.totalorder %s72, %s73
      %p85 = scmp.eq.s32.totalorder %s21, 1
      %p86 = por %p84, %p85
      %p88 = scmp.ne.s32.totalorder %s73, %s87
      %p89 = scmp.eq.s32.totalorder %s21, 0
      %p90 = por %p88, %p89
      %s91 = ssub.s32 %s15, %s22
      %p92 = scmp.eq.s32.totalorder %s91, 0
      %s94 = sadd.s32 %s93, 1
      %s95 = scalar_select %p92, %s93, %s94
      %p98 = pneg %p92
      %p99 = scmp.eq.s32.totalorder %s15, 1
      %p100 = por %p98, %p99
      %p101 = scmp.ne.s32.totalorder %s93, %s96
      %p102 = scmp.eq.s32.totalorder %s15, 0
      %p103 = por %p101, %p102
      %p104 = scmp.ne.s32.totalorder %s93, %s96
      %p105 = scmp.eq.s32.totalorder %s20, 1
      %p106 = por %p104, %p105
      %p107 = scmp.ne.s32.totalorder %s96, %s97
      %p108 = scmp.eq.s32.totalorder %s20, 0
      %p109 = por %p107, %p108
      %p110 = scmp.ne.s32.totalorder %s96, %s97
      %p111 = scmp.eq.s32.totalorder %s21, 1
      %p112 = por %p110, %p111
      %p114 = scmp.ne.s32.totalorder %s97, %s113
      %p115 = scmp.eq.s32.totalorder %s21, 0
      %p116 = por %p114, %p115
      %p117 = scmp.le.s32.totalorder 1, %s15
      %p118 = scmp.lt.s32.totalorder %s15, 3
      %p119 = pnand %p117, %p118
      %p120 = pneg %p119
      // Predicated region
      $region9: #{tpu_custom_call.1} parent=5 // pred_check
        _
      $region10: #{tpu_custom_call.1} parent=5 // pred_check_branch
        %122 = sbr.rel (%p119) target = $region12
      $region11: #{tpu_custom_call.1} parent=5 // pred_region
        %s123 = ssub.s32 %s15, 1
        // Predicated region
        $region13: #{tpu_custom_call.1} parent=11 // pred_check
          %p124 = pneg %p62
        $region14: #{tpu_custom_call.1} parent=11 // pred_check_branch
          %126 = sbr.rel (%p124) target = $region16
        $region15: #{tpu_custom_call.1} parent=11 // pred_region
          _
        $region16: #{tpu_custom_call.1} parent=11 // pred_fallthru
          _
        // Predicated region
        $region17: #{tpu_custom_call.1} parent=11 // pred_check
          %p127 = pneg %p83
        $region18: #{tpu_custom_call.1} parent=11 // pred_check_branch
          %129 = sbr.rel (%p127) target = $region20
        $region19: #{tpu_custom_call.1} parent=11 // pred_region
          _
        $region20: #{tpu_custom_call.1} parent=11 // pred_fallthru
          _
      $region12: #{tpu_custom_call.1} parent=5 // pred_fallthru
        _
      %p130 = scmp.lt.s32.totalorder %s15, 2
      // Predicated region
      $region21: #{tpu_custom_call.1} parent=5 // pred_check
        %p131 = pneg %p130
      $region22: #{tpu_custom_call.1} parent=5 // pred_check_branch
        %133 = sbr.rel (%p131) target = $region24
      $region23: #{tpu_custom_call.1} parent=5 // pred_region
        // Predicated region
        $region25: #{tpu_custom_call.1} parent=23 // pred_check
          %p134 = pneg %p35
        $region26: #{tpu_custom_call.1} parent=23 // pred_check_branch
          %136 = sbr.rel (%p134) target = $region28
        $region27: #{tpu_custom_call.1} parent=23 // pred_region
          %s137 = sand.u32 %s25, 1
          %s138 = scalar_lea.sflag [#allocation3], %s137
          %s139 = sand.u32 %s25, 1
          %s140 = smul.addr %s139, 8
          %s141 = scalar_lea.vmem [#allocation2], %s140
          %s143 = ssub.s32 128, 128
          %144 = vsyncadd %s138, %s143
          %s145 = smul.addr %s15, 128
          %s146 = scalar_lea.hbm %s0, %s145
          %s148 = sshll.u32 %s141, 4
          %s149 = int_to_ptr.vmem [resolvable:$true] %s148
          %151 = dma.hbm_to_vmem [thread:$0]  %s146, 128, %s149, %s138
        $region28: #{tpu_custom_call.1} parent=23 // pred_fallthru
          _
      $region24: #{tpu_custom_call.1} parent=5 // pred_fallthru
        _
      %p152 = scmp.le.s32.totalorder 1, %s15
      %p153 = scmp.lt.s32.totalorder %s15, 3
      %p154 = pnand %p152, %p153
      %p155 = pneg %p154
      // Predicated region
      $region29: #{tpu_custom_call.1} parent=5 // pred_check
        _
      $region30: #{tpu_custom_call.1} parent=5 // pred_check_branch
        %157 = sbr.rel (%p154) target = $region32
      $region31: #{tpu_custom_call.1} parent=5 // pred_region
        %s158 = ssub.s32 %s15, 1
        %s159 = sand.u32 %s28, 1
        %s160 = scalar_lea.sflag [#allocation3], %s159
        %s161 = sand.u32 %s28, 1
        %s162 = smul.addr %s161, 8
        %s163 = scalar_lea.vmem [#allocation2], %s162
        // Predicated region
        $region33: #{tpu_custom_call.1} parent=31 // pred_check
          %p164 = pneg %p41
        $region34: #{tpu_custom_call.1} parent=31 // pred_check_branch
          %166 = sbr.rel (%p164) target = $region36
        $region35: #{tpu_custom_call.1} parent=31 // pred_region
          %167 = dma.done %s160, 128
        $region36: #{tpu_custom_call.1} parent=31 // pred_fallthru
          _
        %s168 = sand.u32 %s28, 1
        %s169 = scalar_lea.sflag [#allocation3], %s168
        %s170 = sand.u32 %s28, 1
        %s171 = smul.addr %s170, 8
        %s172 = scalar_lea.vmem [#allocation2], %s171
        %p173 = pneg %p41
        %p174 = pneg %p38
        %p175 = pneg %p62
        %p176 = pneg %p59
        %p177 = pneg %p83
        %p178 = pneg %p80
        %p179 = pneg %p109
        %p180 = pneg %p106
        %s181 = sand.u32 %s96, 1
        %s182 = scalar_lea.sflag [#allocation4], %s181
        %s183 = sand.u32 %s96, 1
        %s184 = smul.addr %s183, 8
        %s185 = scalar_lea.vmem [#allocation5], %s184
        %v186 = vld [vmem:[%s163] sm:$0xff]
        %vm187 = vcmask 261120
        %v188 = vsel %vm187, %v186, 0.0
        %189 = vadd.xlane.f32.xlu0 %v188
        %v190 = vpop.xlane.xlu0 %189
        %v191 = vmul.f32 %v190, 0.03125
        %v192 = vsub.f32 %v186, %v191
        %v193 = vmul.f32 %v192, %v192
        %v194 = vsel %vm187, %v193, 0.0
        %195 = vadd.xlane.f32.xlu0 %v194
        %v196 = vpop.xlane.xlu0 %195
        %v197 = vmul.f32 %v196, 0.03125
        %v198 = vadd.f32 %v197, 1e-05
        %v199 = vrsqrt.pop %v198
        %v200 = vld [vmem:[%s1] sm:$0x1]
        %v201 = vld [vmem:[%s2] sm:$0x1]
        %v203 = vlaneseq
        %v204 = vshrl.u32 %v203, 7
        %v205 = vsub.s32 0, %v204
        %v206 = vrot.slane %v200, %v205
        %v208 = vmul.f32 %v199, %v206
        %v209 = vmul.f32 %v192, %v208
        %v211 = vlaneseq
        %v212 = vshrl.u32 %v211, 7
        %v213 = vsub.s32 0, %v212
        %v214 = vrot.slane %v201, %v213
        %v216 = vadd.f32 %v209, %v214
        %217 = vst.msk [vmem:[%s185] sm:$0xff] %vm187, %v216
        %s218 = sand.u32 %s96, 1
        %s219 = scalar_lea.sflag [#allocation4], %s218
        %s220 = sand.u32 %s96, 1
        %s221 = smul.addr %s220, 8
        %s222 = scalar_lea.vmem [#allocation5], %s221
        // Predicated region
        $region37: #{tpu_custom_call.1} parent=31 // pred_check
          %p223 = pneg %p106
        $region38: #{tpu_custom_call.1} parent=31 // pred_check_branch
          %225 = sbr.rel (%p223) target = $region40
        $region39: #{tpu_custom_call.1} parent=31 // pred_region
          %s227 = ssub.s32 128, 128
          %228 = vsyncadd %s219, %s227
          %s229 = smul.addr %s20, 128
          %s230 = scalar_lea.hbm %s3, %s229
          %s232 = sshll.u32 %s222, 4
          %s233 = int_to_ptr.vmem [resolvable:$true] %s232
          %235 = dma.vmem_to_hbm [thread:$0]  %s233, 128, %s230, %s219
        $region40: #{tpu_custom_call.1} parent=31 // pred_fallthru
          _
      $region32: #{tpu_custom_call.1} parent=5 // pred_fallthru
        _
      %p236 = scmp.le.s32.totalorder 2, %s15
      // Predicated region
      $region41: #{tpu_custom_call.1} parent=5 // pred_check
        %p237 = pneg %p236
      $region42: #{tpu_custom_call.1} parent=5 // pred_check_branch
        %239 = sbr.rel (%p237) target = $region44
      $region43: #{tpu_custom_call.1} parent=5 // pred_region
        %s240 = ssub.s32 %s15, 2
        // Predicated region
        $region45: #{tpu_custom_call.1} parent=43 // pred_check
          %p241 = pneg %p112
        $region46: #{tpu_custom_call.1} parent=43 // pred_check_branch
          %243 = sbr.rel (%p241) target = $region48
        $region47: #{tpu_custom_call.1} parent=43 // pred_region
          %s244 = sand.u32 %s97, 1
          %s245 = scalar_lea.sflag [#allocation4], %s244
          %s246 = sand.u32 %s97, 1
          %s247 = smul.addr %s246, 8
          %s248 = scalar_lea.vmem [#allocation5], %s247
          %249 = dma.done %s245, 128
        $region48: #{tpu_custom_call.1} parent=43 // pred_fallthru
          _
      $region44: #{tpu_custom_call.1} parent=5 // pred_fallthru
        _
    $region6: #{tpu_custom_call.1} parent=1 // loop_footer
      %s19 = sadd.s32 1, %s15
    $region7: #{tpu_custom_call.1} parent=1 // loop_footer_branch
      %14 = sbr.rel target = $region3
    $region8: #{tpu_custom_call.1} parent=1 // loop_exit
      _
    %250 = vsyncpa [#allocation3], 1
    %s251 = scalar_lea.sflag [#allocation3], 1
    %252 = vsyncpa %s251, 1
    %253 = vsyncpa [#allocation4], 1
    %s254 = scalar_lea.sflag [#allocation4], 1
    %255 = vsyncpa %s254, 1

</llo_original>
